<compile_context>
chip_gen: v5e
topology: v5e:2x2
jax: 0.10.0
libtpu: 0.0.40
codegen_flags: <defaults>
</compile_context>

<pallas_src>
import functools

import jax
import jax.numpy as jnp
from jax import lax
from jax.experimental import pallas as pl
from jax.experimental.pallas import tpu as pltpu


# ------------------------------ fused kernel -------------------------------


def _decoder_kernel(*refs, n_hidden, negative_slope, mxu_dtype):
    """Fused forward: [weight_norm Linear + LeakyReLU] * n_hidden + Linear.

    refs = (z_ref,
            v0_ref, g0_ref, b0_ref, ..., v{n-1}_ref, g{n-1}_ref, b{n-1}_ref,
            w_out_ref, b_out_ref,
            o_ref)
    Weight layout: v/w are (in, out); g/b are (1, out).
    """
    z_ref = refs[0]
    o_ref = refs[-1]
    p = refs[1:-1]

    h = z_ref[...].astype(jnp.float32)                       # (TB, in)

    idx = 0
    for _ in range(n_hidden):
        v_ref, g_ref, b_ref = p[idx], p[idx + 1], p[idx + 2]
        idx += 3
        v = v_ref[...]                                       # (in, out) f32
        # weight-norm scale, applied post-matmul (distributes over contraction)
        s = g_ref[...] * lax.rsqrt(
            jnp.sum(v * v, axis=0, keepdims=True))           # (1, out)
        y = jnp.dot(h.astype(mxu_dtype), v.astype(mxu_dtype),
                    preferred_element_type=jnp.float32)      # MXU, f32 acc
        y = y * s + b_ref[...]
        h = jnp.where(y >= 0.0, y, negative_slope * y)       # LeakyReLU(0.2)

    w_ref, b_ref = p[idx], p[idx + 1]
    y = jnp.dot(h.astype(mxu_dtype), w_ref[...].astype(mxu_dtype),
                preferred_element_type=jnp.float32)
    o_ref[...] = (y + b_ref[...]).astype(o_ref.dtype)


def decoder_forward_pallas(params, z, *, negative_slope=0.2,
                           mxu_dtype=jnp.bfloat16):
    """Single pallas_call running the whole decoder, gridded over batch."""
    batch, enc = z.shape
    hidden = params["hidden"]                   # list of (v(in,out), g, b)
    w_out, b_out = params["out"]                # (arch[0], input_shape), (1, .)
    out_features = w_out.shape[1]

    # Batch tile: largest of these that divides batch; otherwise whole batch.
    tile_b = batch
    for cand in (512, 256, 128):
        if batch % cand == 0:
            tile_b = cand
            break
    grid = (batch // tile_b,)

    def _resident(shape):
        # Weights/biases stay resident in VMEM across all batch tiles.
        return pl.BlockSpec(shape, lambda i: (0, 0))

    flat_inputs = [z]
    in_specs = [pl.BlockSpec((tile_b, enc), lambda i: (i, 0))]
    for v, g, b in hidden:
        flat_inputs += [v, g, b]
        in_specs += [_resident(v.shape), _resident(g.shape), _resident(b.shape)]
    flat_inputs += [w_out, b_out]
    in_specs += [_resident(w_out.shape), _resident(b_out.shape)]

    kernel = functools.partial(
        _decoder_kernel,
        n_hidden=len(hidden),
        negative_slope=negative_slope,
        mxu_dtype=mxu_dtype,
    )
    return pl.pallas_call(
        kernel,
        out_shape=jax.ShapeDtypeStruct((batch, out_features), jnp.float32),
        grid=grid,
        in_specs=in_specs,
        out_specs=pl.BlockSpec((tile_b, out_features), lambda i: (i, 0)),
        compiler_params=pltpu.CompilerParams(
            dimension_semantics=("parallel",)),   # shard batch over TCs (v7x)
    )(*flat_inputs)


# --------------------------- parameter construction -------------------------


def init_decoder_params(key, input_shape, encoded_size, arch):
    """Deterministic init mirroring the PyTorch module structure.

    Hidden layers (reversed(arch)): weight_norm(Linear(in, out)).
    Output layer: Linear(arch[0], input_shape).
    Weights are stored pre-transposed as (in, out); g/bias as (1, out).
    weight_norm init sets g := ||v||_2 per output neuron, so w == v initially.
    """
    params = {"hidden": [], "out": None}
    inputs = encoded_size
    for arc in reversed(arch):
        key, k_v, k_b = jax.random.split(key, 3)
        bound = 1.0 / (inputs ** 0.5)
        v_pt = jax.random.uniform(k_v, (arc, inputs), jnp.float32, -bound, bound)
        v = v_pt.T                                                   # (in, out)
        g = jnp.sqrt(jnp.sum(v_pt * v_pt, axis=1)).reshape(1, arc)   # (1, out)
        b = jax.random.uniform(k_b, (1, arc), jnp.float32, -bound, bound)
        params["hidden"].append((v, g, b))
        inputs = arc

    key, k_w, k_b = jax.random.split(key, 3)
    bound = 1.0 / (arch[0] ** 0.5)
    w_pt = jax.random.uniform(k_w, (input_shape, arch[0]), jnp.float32,
                              -bound, bound)
    b = jax.random.uniform(k_b, (1, input_shape), jnp.float32, -bound, bound)
    params["out"] = (w_pt.T, b)                                      # (in, out)
    return params


# ------------------------------ pure-JAX reference ---------------------------


def decoder_forward_ref(params, z, *, negative_slope=0.2,
                        mxu_dtype=jnp.bfloat16):
    """Reference matching the PyTorch forward semantics (same MXU precision)."""
    h = z.astype(jnp.float32)
    for v, g, b in params["hidden"]:
        s = g * lax.rsqrt(jnp.sum(v * v, axis=0, keepdims=True))
        y = jnp.dot(h.astype(mxu_dtype), v.astype(mxu_dtype),
                    preferred_element_type=jnp.float32)
        y = y * s + b
        h = jnp.where(y >= 0.0, y, negative_slope * y)
    w, b = params["out"]
    y = jnp.dot(h.astype(mxu_dtype), w.astype(mxu_dtype),
                preferred_element_type=jnp.float32)
    return y + b


# ----------------------------------- main -----------------------------------

if __name__ == "__main__":
    # Decoder(input_shape=128, encoded_size=32, arch=[64, 48]) on z: (2, 32).
    input_shape = 128
    encoded_size = 32
    arch = [64, 48]
    batch = 2

    key = jax.random.PRNGKey(0)
    key, k_z = jax.random.split(key)
    z = jax.random.normal(k_z, (batch, encoded_size), jnp.float32)

    params = init_decoder_params(key, input_shape, encoded_size, arch)

    # bf16 MXU inputs (production path), checked against a bf16-matmul reference.
    out = decoder_forward_pallas(params, z, mxu_dtype=jnp.bfloat16)
    out = jax.block_until_ready(out)
    ref = decoder_forward_ref(params, z, mxu_dtype=jnp.bfloat16)
    assert out.shape == (batch, input_shape), out.shape
    assert jnp.allclose(out, ref, atol=1e-3, rtol=1e-3), (
        float(jnp.max(jnp.abs(out - ref))))

    # Full-f32 path, checked tightly against the f32 reference.
    out32 = decoder_forward_pallas(params, z, mxu_dtype=jnp.float32)
    out32 = jax.block_until_ready(out32)
    ref32 = decoder_forward_ref(params, z, mxu_dtype=jnp.float32)
    assert jnp.allclose(out32, ref32, atol=1e-5, rtol=1e-5), (
        float(jnp.max(jnp.abs(out32 - ref32))))

    print("KERNEL_OK")
</pallas_src>

<mosaic_0001>
module attributes {stable_mosaic.version = 11 : i64} {
  func.func @_decoder_kernel(%arg0: i32, %arg1: memref<2x32xf32, #tpu.memory_space<vmem>>, %arg2: memref<32x48xf32, #tpu.memory_space<vmem>>, %arg3: memref<1x48xf32, #tpu.memory_space<vmem>>, %arg4: memref<1x48xf32, #tpu.memory_space<vmem>>, %arg5: memref<48x64xf32, #tpu.memory_space<vmem>>, %arg6: memref<1x64xf32, #tpu.memory_space<vmem>>, %arg7: memref<1x64xf32, #tpu.memory_space<vmem>>, %arg8: memref<64x128xf32, #tpu.memory_space<vmem>>, %arg9: memref<1x128xf32, #tpu.memory_space<vmem>>, %arg10: memref<2x128xf32, #tpu.memory_space<vmem>>) attributes {dimension_semantics = [#tpu.dimension_semantics<parallel>], iteration_bounds = array<i64: 1>, scalar_prefetch = 0 : i64, scratch_operands = 0 : i64, tpu.core_type = #tpu.core_type<tc>, window_params = [{transform_indices = @transform_0, window_bounds = array<i64: 2, 32>}, {pipeline_mode = #tpu.pipeline_mode<synchronous>, transform_indices = @transform_1, window_bounds = array<i64: 32, 48>}, {pipeline_mode = #tpu.pipeline_mode<synchronous>, transform_indices = @transform_2, window_bounds = array<i64: 1, 48>}, {pipeline_mode = #tpu.pipeline_mode<synchronous>, transform_indices = @transform_3, window_bounds = array<i64: 1, 48>}, {pipeline_mode = #tpu.pipeline_mode<synchronous>, transform_indices = @transform_4, window_bounds = array<i64: 48, 64>}, {pipeline_mode = #tpu.pipeline_mode<synchronous>, transform_indices = @transform_5, window_bounds = array<i64: 1, 64>}, {pipeline_mode = #tpu.pipeline_mode<synchronous>, transform_indices = @transform_6, window_bounds = array<i64: 1, 64>}, {pipeline_mode = #tpu.pipeline_mode<synchronous>, transform_indices = @transform_7, window_bounds = array<i64: 64, 128>}, {pipeline_mode = #tpu.pipeline_mode<synchronous>, transform_indices = @transform_8, window_bounds = array<i64: 1, 128>}, {transform_indices = @transform_9, window_bounds = array<i64: 2, 128>}]} {
    %c0 = arith.constant 0 : index
    %c0_0 = arith.constant 0 : index
    %0 = vector.load %arg1[%c0, %c0_0] : memref<2x32xf32, #tpu.memory_space<vmem>>, vector<2x32xf32>
    %c0_1 = arith.constant 0 : index
    %c0_2 = arith.constant 0 : index
    %1 = vector.load %arg2[%c0_1, %c0_2] : memref<32x48xf32, #tpu.memory_space<vmem>>, vector<32x48xf32>
    %c0_3 = arith.constant 0 : index
    %c0_4 = arith.constant 0 : index
    %2 = vector.load %arg3[%c0_3, %c0_4] : memref<1x48xf32, #tpu.memory_space<vmem>>, vector<1x48xf32>
    %3 = arith.mulf %1, %1 : vector<32x48xf32>
    %cst = arith.constant dense<0.000000e+00> : vector<48xf32>
    %4 = vector.multi_reduction <add>, %3, %cst [0] : vector<32x48xf32> to vector<48xf32>
    %5 = vector.shape_cast %4 : vector<48xf32> to vector<1x48xf32>
    %6 = math.rsqrt %5 : vector<1x48xf32>
    %7 = arith.mulf %2, %6 : vector<1x48xf32>
    %8 = arith.truncf %0 : vector<2x32xf32> to vector<2x32xbf16>
    %9 = arith.truncf %1 : vector<32x48xf32> to vector<32x48xbf16>
    %cst_5 = arith.constant dense<0.000000e+00> : vector<2x48xf32>
    %10 = tpu.matmul %8, %9, %cst_5 {dimension_numbers = #tpu.dot_dimension_numbers<[1], [0], [0], [1], [0, 0, 1, 1], [], []>} : vector<2x32xbf16>, vector<32x48xbf16>, vector<2x48xf32> -> vector<2x48xf32>
    %11 = vector.broadcast %7 : vector<1x48xf32> to vector<2x48xf32>
    %12 = arith.mulf %10, %11 : vector<2x48xf32>
    %c0_6 = arith.constant 0 : index
    %c0_7 = arith.constant 0 : index
    %13 = vector.load %arg4[%c0_6, %c0_7] : memref<1x48xf32, #tpu.memory_space<vmem>>, vector<1x48xf32>
    %14 = vector.broadcast %13 : vector<1x48xf32> to vector<2x48xf32>
    %15 = arith.addf %12, %14 : vector<2x48xf32>
    %cst_8 = arith.constant 0.000000e+00 : f32
    %16 = vector.broadcast %cst_8 : f32 to vector<2x48xf32>
    %17 = arith.cmpf oge, %15, %16 : vector<2x48xf32>
    %cst_9 = arith.constant 2.000000e-01 : f32
    %18 = vector.broadcast %cst_9 : f32 to vector<2x48xf32>
    %19 = arith.mulf %18, %15 : vector<2x48xf32>
    %20 = arith.select %17, %15, %19 : vector<2x48xi1>, vector<2x48xf32>
    %c0_10 = arith.constant 0 : index
    %c0_11 = arith.constant 0 : index
    %21 = vector.load %arg5[%c0_10, %c0_11] : memref<48x64xf32, #tpu.memory_space<vmem>>, vector<48x64xf32>
    %c0_12 = arith.constant 0 : index
    %c0_13 = arith.constant 0 : index
    %22 = vector.load %arg6[%c0_12, %c0_13] : memref<1x64xf32, #tpu.memory_space<vmem>>, vector<1x64xf32>
    %23 = arith.mulf %21, %21 : vector<48x64xf32>
    %cst_14 = arith.constant dense<0.000000e+00> : vector<64xf32>
    %24 = vector.multi_reduction <add>, %23, %cst_14 [0] : vector<48x64xf32> to vector<64xf32>
    %25 = vector.shape_cast %24 : vector<64xf32> to vector<1x64xf32>
    %26 = math.rsqrt %25 : vector<1x64xf32>
    %27 = arith.mulf %22, %26 : vector<1x64xf32>
    %28 = arith.truncf %20 : vector<2x48xf32> to vector<2x48xbf16>
    %29 = arith.truncf %21 : vector<48x64xf32> to vector<48x64xbf16>
    %cst_15 = arith.constant dense<0.000000e+00> : vector<2x64xf32>
    %30 = tpu.matmul %28, %29, %cst_15 {dimension_numbers = #tpu.dot_dimension_numbers<[1], [0], [0], [1], [0, 0, 1, 1], [], []>} : vector<2x48xbf16>, vector<48x64xbf16>, vector<2x64xf32> -> vector<2x64xf32>
    %31 = vector.broadcast %27 : vector<1x64xf32> to vector<2x64xf32>
    %32 = arith.mulf %30, %31 : vector<2x64xf32>
    %c0_16 = arith.constant 0 : index
    %c0_17 = arith.constant 0 : index
    %33 = vector.load %arg7[%c0_16, %c0_17] : memref<1x64xf32, #tpu.memory_space<vmem>>, vector<1x64xf32>
    %34 = vector.broadcast %33 : vector<1x64xf32> to vector<2x64xf32>
    %35 = arith.addf %32, %34 : vector<2x64xf32>
    %cst_18 = arith.constant 0.000000e+00 : f32
    %36 = vector.broadcast %cst_18 : f32 to vector<2x64xf32>
    %37 = arith.cmpf oge, %35, %36 : vector<2x64xf32>
    %cst_19 = arith.constant 2.000000e-01 : f32
    %38 = vector.broadcast %cst_19 : f32 to vector<2x64xf32>
    %39 = arith.mulf %38, %35 : vector<2x64xf32>
    %40 = arith.select %37, %35, %39 : vector<2x64xi1>, vector<2x64xf32>
    %41 = arith.truncf %40 : vector<2x64xf32> to vector<2x64xbf16>
    %c0_20 = arith.constant 0 : index
    %c0_21 = arith.constant 0 : index
    %42 = vector.load %arg8[%c0_20, %c0_21] : memref<64x128xf32, #tpu.memory_space<vmem>>, vector<64x128xf32>
    %43 = arith.truncf %42 : vector<64x128xf32> to vector<64x128xbf16>
    %cst_22 = arith.constant dense<0.000000e+00> : vector<2x128xf32>
    %44 = tpu.matmul %41, %43, %cst_22 {dimension_numbers = #tpu.dot_dimension_numbers<[1], [0], [0], [1], [0, 0, 1, 1], [], []>} : vector<2x64xbf16>, vector<64x128xbf16>, vector<2x128xf32> -> vector<2x128xf32>
    %c0_23 = arith.constant 0 : index
    %c0_24 = arith.constant 0 : index
    %45 = vector.load %arg9[%c0_23, %c0_24] : memref<1x128xf32, #tpu.memory_space<vmem>>, vector<1x128xf32>
    %46 = vector.broadcast %45 : vector<1x128xf32> to vector<2x128xf32>
    %47 = arith.addf %44, %46 : vector<2x128xf32>
    %c0_25 = arith.constant 0 : index
    %c0_26 = arith.constant 0 : index
    %48 = vector.load %arg10[%c0_25, %c0_26] : memref<2x128xf32, #tpu.memory_space<vmem>>, vector<2x128xf32>
    tpu.vector_store %arg10[%c0_25, %c0_26], %47 {strides = array<i32>} : memref<2x128xf32, #tpu.memory_space<vmem>>, vector<2x128xf32>,
    return
  }
  func.func @transform_0(%arg0: i32) -> (i32, i32) {
    %c0_i32 = arith.constant 0 : i32
    %c0_i32_0 = arith.constant 0 : i32
    return %arg0, %c0_i32 : i32, i32
  }
  func.func @transform_1(%arg0: i32) -> (i32, i32) {
    %c0_i32 = arith.constant 0 : i32
    %c0_i32_0 = arith.constant 0 : i32
    %c0_i32_1 = arith.constant 0 : i32
    return %c0_i32, %c0_i32_0 : i32, i32
  }
  func.func @transform_2(%arg0: i32) -> (i32, i32) {
    %c0_i32 = arith.constant 0 : i32
    %c0_i32_0 = arith.constant 0 : i32
    %c0_i32_1 = arith.constant 0 : i32
    return %c0_i32, %c0_i32_0 : i32, i32
  }
  func.func @transform_3(%arg0: i32) -> (i32, i32) {
    %c0_i32 = arith.constant 0 : i32
    %c0_i32_0 = arith.constant 0 : i32
    %c0_i32_1 = arith.constant 0 : i32
    return %c0_i32, %c0_i32_0 : i32, i32
  }
  func.func @transform_4(%arg0: i32) -> (i32, i32) {
    %c0_i32 = arith.constant 0 : i32
    %c0_i32_0 = arith.constant 0 : i32
    %c0_i32_1 = arith.constant 0 : i32
    return %c0_i32, %c0_i32_0 : i32, i32
  }
  func.func @transform_5(%arg0: i32) -> (i32, i32) {
    %c0_i32 = arith.constant 0 : i32
    %c0_i32_0 = arith.constant 0 : i32
    %c0_i32_1 = arith.constant 0 : i32
    return %c0_i32, %c0_i32_0 : i32, i32
  }
  func.func @transform_6(%arg0: i32) -> (i32, i32) {
    %c0_i32 = arith.constant 0 : i32
    %c0_i32_0 = arith.constant 0 : i32
    %c0_i32_1 = arith.constant 0 : i32
    return %c0_i32, %c0_i32_0 : i32, i32
  }
  func.func @transform_7(%arg0: i32) -> (i32, i32) {
    %c0_i32 = arith.constant 0 : i32
    %c0_i32_0 = arith.constant 0 : i32
    %c0_i32_1 = arith.constant 0 : i32
    return %c0_i32, %c0_i32_0 : i32, i32
  }
  func.func @transform_8(%arg0: i32) -> (i32, i32) {
    %c0_i32 = arith.constant 0 : i32
    %c0_i32_0 = arith.constant 0 : i32
    %c0_i32_1 = arith.constant 0 : i32
    return %c0_i32, %c0_i32_0 : i32, i32
  }
  func.func @transform_9(%arg0: i32) -> (i32, i32) {
    %c0_i32 = arith.constant 0 : i32
    %c0_i32_0 = arith.constant 0 : i32
    return %arg0, %c0_i32 : i32, i32
  }
}

</mosaic_0001>

<llo_original>
// kernel: tpu_custom_call.1
$region0: #{tpu_custom_call.1}
  #allocation0 [shape = 'u32[]', space=smem, size = 0x4, offset = 0x4, fixed_abs, tag = 'smem constant byte address 0x4 - core index']
  #allocation1 [shape = 'u32[72,128]{1,0:T(1,128)}', space=vmem, size = 0x9000, scoped, tag = 'internal scratch']
  %s0 = inlined_call_operand.hbm [shape: f32[2,32], index: 0, kind: input, shape index: {}]
  %s1 = inlined_call_operand.hbm [shape: f32[32,48], index: 1, kind: input, shape index: {}]
  %s2 = inlined_call_operand.vmem [shape: f32[1,48], index: 2, kind: input, shape index: {}]
  %s3 = inlined_call_operand.vmem [shape: f32[1,48], index: 3, kind: input, shape index: {}]
  %s4 = inlined_call_operand.hbm [shape: f32[48,64], index: 4, kind: input, shape index: {}]
  %s5 = inlined_call_operand.vmem [shape: f32[1,64], index: 5, kind: input, shape index: {}]
  %s6 = inlined_call_operand.vmem [shape: f32[1,64], index: 6, kind: input, shape index: {}]
  %s7 = inlined_call_operand.hbm [shape: f32[64,128], index: 7, kind: input, shape index: {}]
  %s8 = inlined_call_operand.vmem [shape: f32[1,128], index: 8, kind: input, shape index: {}]
  %s9 = inlined_call_operand.hbm [shape: f32[2,128], index: 9, kind: output, shape index: {}]
  %s10 = sld [smem:[#allocation0]]
  $region62: #{tpu_custom_call.1} parent=0
    _
  %s12 = ssub.s32 1, %s10
  %s13 = scalar_select 0, %s12, %s10
  $region1: #{tpu_custom_call.1} parent=0
    #allocation2 [shape = 'u8[1024]{0}', space=vmem, size = 0x400, scoped, tag = 'input window, operand 0, single buffered']
    #allocation3 [shape = 's32[1]{0}', space=sflag, size = 0x4, scoped, tag = 'scoped memory for tpu_custom_call.1']
    #allocation4 [shape = 's32[1]{0}', space=sflag, size = 0x4, scoped, tag = 'scoped memory for tpu_custom_call.1']
    #allocation5 [shape = 'u8[16384]{0}', space=vmem, size = 0x4000, scoped, tag = 'input window, operand 1, single buffered']
    #allocation6 [shape = 's32[1]{0}', space=sflag, size = 0x4, scoped, tag = 'scoped memory for tpu_custom_call.1']
    #allocation7 [shape = 'u8[24576]{0}', space=vmem, size = 0x6000, scoped, tag = 'input window, operand 4, single buffered']
    #allocation8 [shape = 'u8[32768]{0}', space=vmem, size = 0x8000, scoped, tag = 'input window, operand 7, single buffered']
    #allocation9 [shape = 's32[1]{0}', space=sflag, size = 0x4, scoped, tag = 'scoped memory for tpu_custom_call.1']
    #allocation10 [shape = 'u8[1024]{0}', space=vmem, size = 0x400, scoped, tag = 'output window, operand 0, single buffered']
    %14 = vsyncpa [#allocation3], 0
    %15 = vsyncpa [#allocation6], 0
    %16 = vsyncpa [#allocation9], 0
    %17 = vsyncpa [#allocation4], 0
    // Predicated region
    $region2: #{tpu_custom_call.1} parent=1 // pred_check
      _
    $region3: #{tpu_custom_call.1} parent=1 // pred_check_branch
      %19 = sbr.rel (0) target = $region5
    $region4: #{tpu_custom_call.1} parent=1 // pred_region
      %21 = vsyncadd [#allocation3], 0
      %s23 = sshll.u32 %s0, 4
      %s24 = int_to_ptr.hbm [resolvable:$true] %s23
      %s25 = sshll.u32 [#allocation2], 4
      %s26 = int_to_ptr.vmem [resolvable:$true] %s25
      %28 = dma.hbm_to_vmem [thread:$0]  %s24, 32, %s26, [#allocation3]
    $region5: #{tpu_custom_call.1} parent=1 // pred_fallthru
      _
    // Predicated region
    $region6: #{tpu_custom_call.1} parent=1 // pred_check
      _
    $region7: #{tpu_custom_call.1} parent=1 // pred_check_branch
      %30 = sbr.rel (0) target = $region9
    $region8: #{tpu_custom_call.1} parent=1 // pred_region
      %32 = vsyncadd [#allocation6], 0
      %s33 = sshll.u32 %s1, 4
      %s34 = int_to_ptr.hbm [resolvable:$true] %s33
      %s35 = sshll.u32 [#allocation5], 4
      %s36 = int_to_ptr.vmem [resolvable:$true] %s35
      %41 = dma.hbm_to_vmem [thread:$0]  %s34, 512, %s36, [#allocation6], 128, 128, 8
    $region9: #{tpu_custom_call.1} parent=1 // pred_fallthru
      _
    // Predicated region
    $region10: #{tpu_custom_call.1} parent=1 // pred_check
      _
    $region11: #{tpu_custom_call.1} parent=1 // pred_check_branch
      %43 = sbr.rel (0) target = $region13
    $region12: #{tpu_custom_call.1} parent=1 // pred_region
      _
    $region13: #{tpu_custom_call.1} parent=1 // pred_fallthru
      _
    // Predicated region
    $region14: #{tpu_custom_call.1} parent=1 // pred_check
      _
    $region15: #{tpu_custom_call.1} parent=1 // pred_check_branch
      %45 = sbr.rel (0) target = $region17
    $region16: #{tpu_custom_call.1} parent=1 // pred_region
      _
    $region17: #{tpu_custom_call.1} parent=1 // pred_fallthru
      _
    // Predicated region
    $region18: #{tpu_custom_call.1} parent=1 // pred_check
      _
    $region19: #{tpu_custom_call.1} parent=1 // pred_check_branch
      %47 = sbr.rel (0) target = $region21
    $region20: #{tpu_custom_call.1} parent=1 // pred_region
      %49 = vsyncadd [#allocation6], 0
      %s50 = sshll.u32 %s4, 4
      %s51 = int_to_ptr.hbm [resolvable:$true] %s50
      %s52 = sshll.u32 [#allocation7], 4
      %s53 = int_to_ptr.vmem [resolvable:$true] %s52
      %58 = dma.hbm_to_vmem [thread:$0]  %s51, 768, %s53, [#allocation6], 128, 128, 8
    $region21: #{tpu_custom_call.1} parent=1 // pred_fallthru
      _
    // Predicated region
    $region22: #{tpu_custom_call.1} parent=1 // pred_check
      _
    $region23: #{tpu_custom_call.1} parent=1 // pred_check_branch
      %60 = sbr.rel (0) target = $region25
    $region24: #{tpu_custom_call.1} parent=1 // pred_region
      _
    $region25: #{tpu_custom_call.1} parent=1 // pred_fallthru
      _
    // Predicated region
    $region26: #{tpu_custom_call.1} parent=1 // pred_check
      _
    $region27: #{tpu_custom_call.1} parent=1 // pred_check_branch
      %62 = sbr.rel (0) target = $region29
    $region28: #{tpu_custom_call.1} parent=1 // pred_region
      _
    $region29: #{tpu_custom_call.1} parent=1 // pred_fallthru
      _
    // Predicated region
    $region30: #{tpu_custom_call.1} parent=1 // pred_check
      _
    $region31: #{tpu_custom_call.1} parent=1 // pred_check_branch
      %64 = sbr.rel (0) target = $region33
    $region32: #{tpu_custom_call.1} parent=1 // pred_region
      %66 = vsyncadd [#allocation9], 0
      %s67 = sshll.u32 %s7, 4
      %s68 = int_to_ptr.hbm [resolvable:$true] %s67
      %s69 = sshll.u32 [#allocation8], 4
      %s70 = int_to_ptr.vmem [resolvable:$true] %s69
      %75 = dma.hbm_to_vmem [thread:$0]  %s68, 1024, %s70, [#allocation9], 128, 128, 8
    $region33: #{tpu_custom_call.1} parent=1 // pred_fallthru
      _
    // Predicated region
    $region34: #{tpu_custom_call.1} parent=1 // pred_check
      _
    $region35: #{tpu_custom_call.1} parent=1 // pred_check_branch
      %77 = sbr.rel (0) target = $region37
    $region36: #{tpu_custom_call.1} parent=1 // pred_region
      _
    $region37: #{tpu_custom_call.1} parent=1 // pred_fallthru
      _
    // Predicated region
    $region38: #{tpu_custom_call.1} parent=1 // pred_check
      _
    $region39: #{tpu_custom_call.1} parent=1 // pred_check_branch
      %79 = sbr.rel (0) target = $region41
    $region40: #{tpu_custom_call.1} parent=1 // pred_region
      %81 = dma.done [#allocation3], 32
    $region41: #{tpu_custom_call.1} parent=1 // pred_fallthru
      _
    // Predicated region
    $region42: #{tpu_custom_call.1} parent=1 // pred_check
      _
    $region43: #{tpu_custom_call.1} parent=1 // pred_check_branch
      %83 = sbr.rel (0) target = $region45
    $region44: #{tpu_custom_call.1} parent=1 // pred_region
      %85 = dma.done [#allocation6], 512
    $region45: #{tpu_custom_call.1} parent=1 // pred_fallthru
      _
    // Predicated region
    $region46: #{tpu_custom_call.1} parent=1 // pred_check
      _
    $region47: #{tpu_custom_call.1} parent=1 // pred_check_branch
      %87 = sbr.rel (0) target = $region49
    $region48: #{tpu_custom_call.1} parent=1 // pred_region
      %89 = dma.done [#allocation6], 768
    $region49: #{tpu_custom_call.1} parent=1 // pred_fallthru
      _
    // Predicated region
    $region50: #{tpu_custom_call.1} parent=1 // pred_check
      _
    $region51: #{tpu_custom_call.1} parent=1 // pred_check_branch
      %91 = sbr.rel (0) target = $region53
    $region52: #{tpu_custom_call.1} parent=1 // pred_region
      %93 = dma.done [#allocation9], 1024
    $region53: #{tpu_custom_call.1} parent=1 // pred_fallthru
      _
    %v95 = vld [vmem:[#allocation2] sm:$0x3]
    %v96 = vld [vmem:[#allocation5] sm:$0xff]
    %v97 = vld [vmem:[#allocation5 + $0x8] sm:$0xff]
    %v98 = vld [vmem:[#allocation5 + $0x10] sm:$0xff]
    %v99 = vld [vmem:[#allocation5 + $0x18] sm:$0xff]
    %v100 = vld [vmem:[%s2] sm:$0x1]
    %v101 = vmul.f32 %v96, %v96
    %v102 = vmul.f32 %v97, %v97
    %v103 = vmul.f32 %v98, %v98
    %v104 = vmul.f32 %v99, %v99
    %vm105 = vcmask 392192
    %v106 = vsel %vm105, %v101, 0.0
    %v107 = vsel %vm105, %v102, 0.0
    %v108 = vadd.f32 %v106, %v107
    %v109 = vsel %vm105, %v103, 0.0
    %v110 = vadd.f32 %v108, %v109
    %v111 = vsel %vm105, %v104, 0.0
    %v112 = vadd.f32 %v110, %v111
    %v113 = vrot.slane %v112, 4
    %v114 = vadd.f32 %v112, %v113
    %v115 = vrot.slane %v114, 2
    %v116 = vadd.f32 %v114, %v115
    %v117 = vrot.slane %v116, 1
    %v118 = vadd.f32 %v116, %v117
    %v119 = vrsqrt.pop %v118
    %v120 = vmul.f32 %v119, %v118
    %v121 = vmul.f32 %v120, %v119
    %v122 = vmul.f32 0.5, %v121
    %v123 = vsub.f32 1.5, %v122
    %v124 = vmul.f32 %v119, %v123
    %vm125 = vweird.f32 %v118
    %vm126 = vweird.f32 %v119
    %vm127 = vmor %vm125, %vm126
    %v128 = vsel %vm127, %v119, %v124
    %v129 = vmul.f32 %v100, %v128
    %v130 = vpack.c.bf16 %v95, %v95
    %v131 = vpack.c.bf16 %v97, %v96
    %v132 = vpack.c.bf16 %v99, %v98
    %vm133 = vcmask 261120
    %v135 = vsel %vm133, %v130, 0
    %137 = vmatpush.bf16.msra.mxu0 0
    %138 = vmatpush.bf16.msra.mxu0 0
    %139 = vmatpush.bf16.msra.mxu0 0
    %140 = vmatpush.bf16.msra.mxu0 0
    %141 = vmatpush.bf16.msra.mxu0 0
    %142 = vmatpush.bf16.msra.mxu0 0
    %143 = vmatpush.bf16.msra.mxu0 %v132
    %144 = vmatpush.bf16.msra.mxu0 %v131
    %145 = vmatmul.bf16.gmra.mxu0 %v135
    %v146 = vpop.f32.mrf.mxu0
    %v147 = vadd.f32 0.0, %v146
    %v148 = vpop.f32.mrf.mxu0
    %149 = vdwg.mxu0
    %v151 = vperm.slane %v129, 0
    %v153 = vmul.f32 %v147, %v151
    %v154 = vld [vmem:[%s3] sm:$0x1]
    %v156 = vperm.slane %v154, 0
    %v158 = vadd.f32 %v153, %v156
    %vm159 = vcmp.ge.f32.partialorder %v158, 0.0
    %v160 = vmul.f32 %v158, 0.2
    %v161 = vsel %vm159, %v158, %v160
    %v162 = vld [vmem:[#allocation7] sm:$0xff]
    %v163 = vld [vmem:[#allocation7 + $0x8] sm:$0xff]
    %v164 = vld [vmem:[#allocation7 + $0x10] sm:$0xff]
    %v165 = vld [vmem:[#allocation7 + $0x18] sm:$0xff]
    %v166 = vld [vmem:[#allocation7 + $0x20] sm:$0xff]
    %v167 = vld [vmem:[#allocation7 + $0x28] sm:$0xff]
    %v168 = vld [vmem:[%s5] sm:$0x1]
    %v169 = vmul.f32 %v162, %v162
    %v170 = vmul.f32 %v163, %v163
    %v171 = vmul.f32 %v164, %v164
    %v172 = vmul.f32 %v165, %v165
    %v173 = vmul.f32 %v166, %v166
    %v174 = vmul.f32 %v167, %v167
    %vm175 = vcmask 523264
    %v176 = vsel %vm175, %v169, 0.0
    %v177 = vsel %vm175, %v170, 0.0
    %v178 = vadd.f32 %v176, %v177
    %v179 = vsel %vm175, %v171, 0.0
    %v180 = vadd.f32 %v178, %v179
    %v181 = vsel %vm175, %v172, 0.0
    %v182 = vadd.f32 %v180, %v181
    %v183 = vsel %vm175, %v173, 0.0
    %v184 = vadd.f32 %v182, %v183
    %v185 = vsel %vm175, %v174, 0.0
    %v186 = vadd.f32 %v184, %v185
    %v187 = vrot.slane %v186, 4
    %v188 = vadd.f32 %v186, %v187
    %v189 = vrot.slane %v188, 2
    %v190 = vadd.f32 %v188, %v189
    %v191 = vrot.slane %v190, 1
    %v192 = vadd.f32 %v190, %v191
    %v193 = vrsqrt.pop %v192
    %v194 = vmul.f32 %v193, %v192
    %v195 = vmul.f32 %v194, %v193
    %v196 = vmul.f32 0.5, %v195
    %v197 = vsub.f32 1.5, %v196
    %v198 = vmul.f32 %v193, %v197
    %vm199 = vweird.f32 %v192
    %vm200 = vweird.f32 %v193
    %vm201 = vmor %vm199, %vm200
    %v202 = vsel %vm201, %v193, %v198
    %v203 = vmul.f32 %v168, %v202
    %v204 = vpack.c.bf16 %v161, %v161
    %v205 = vpack.c.bf16 %v163, %v162
    %v206 = vpack.c.bf16 %v165, %v164
    %v207 = vpack.c.bf16 %v167, %v166
    %v209 = vsel %vm105, %v204, 0
    %211 = vmatpush.bf16.msra.mxu0 0
    %212 = vmatpush.bf16.msra.mxu0 0
    %213 = vmatpush.bf16.msra.mxu0 0
    %214 = vmatpush.bf16.msra.mxu0 0
    %215 = vmatpush.bf16.msra.mxu0 0
    %216 = vmatpush.bf16.msra.mxu0 %v207
    %217 = vmatpush.bf16.msra.mxu0 %v206
    %218 = vmatpush.bf16.msra.mxu0 %v205
    %219 = vmatmul.bf16.gmra.mxu0 %v209
    %v220 = vpop.f32.mrf.mxu0
    %v221 = vadd.f32 0.0, %v220
    %v222 = vpop.f32.mrf.mxu0
    %223 = vdwg.mxu0
    %v225 = vperm.slane %v203, 0
    %v227 = vmul.f32 %v221, %v225
    %v228 = vld [vmem:[%s6] sm:$0x1]
    %v230 = vperm.slane %v228, 0
    %v232 = vadd.f32 %v227, %v230
    %vm233 = vcmp.ge.f32.partialorder %v232, 0.0
    %v234 = vmul.f32 %v232, 0.2
    %v235 = vsel %vm233, %v232, %v234
    %v236 = vpack.c.bf16 %v235, %v235
    %v237 = vld [vmem:[#allocation8] sm:$0xff]
    %v238 = vld [vmem:[#allocation8 + $0x8] sm:$0xff]
    %v239 = vld [vmem:[#allocation8 + $0x10] sm:$0xff]
    %v240 = vld [vmem:[#allocation8 + $0x18] sm:$0xff]
    %v241 = vld [vmem:[#allocation8 + $0x20] sm:$0xff]
    %v242 = vld [vmem:[#allocation8 + $0x28] sm:$0xff]
    %v243 = vld [vmem:[#allocation8 + $0x30] sm:$0xff]
    %v244 = vld [vmem:[#allocation8 + $0x38] sm:$0xff]
    %v245 = vpack.c.bf16 %v238, %v237
    %v246 = vpack.c.bf16 %v240, %v239
    %v247 = vpack.c.bf16 %v242, %v241
    %v248 = vpack.c.bf16 %v244, %v243
    %v249 = vld [vmem:[%s8] sm:$0x1]
    %v251 = vperm.slane %v249, 0
    %v254 = vsel %vm175, %v236, 0
    %256 = vmatpush.bf16.msra.mxu0 0
    %257 = vmatpush.bf16.msra.mxu0 0
    %258 = vmatpush.bf16.msra.mxu0 0
    %259 = vmatpush.bf16.msra.mxu0 0
    %260 = vmatpush.bf16.msra.mxu0 %v248
    %261 = vmatpush.bf16.msra.mxu0 %v247
    %262 = vmatpush.bf16.msra.mxu0 %v246
    %263 = vmatpush.bf16.msra.mxu0 %v245
    %264 = vmatmul.bf16.gmra.mxu0 %v254
    %v265 = vpop.f32.mrf.mxu0
    %v266 = vadd.f32 %v251, %v265
    %v267 = vpop.f32.mrf.mxu0
    %268 = vdwg.mxu0
    %269 = vst [vmem:[#allocation10] sm:$0x3] %v266
    // Predicated region
    $region54: #{tpu_custom_call.1} parent=1 // pred_check
      _
    $region55: #{tpu_custom_call.1} parent=1 // pred_check_branch
      %271 = sbr.rel (0) target = $region57
    $region56: #{tpu_custom_call.1} parent=1 // pred_region
      %273 = vsyncadd [#allocation4], 0
      %s275 = sshll.u32 [#allocation10], 4
      %s276 = int_to_ptr.vmem [resolvable:$true] %s275
      %s277 = sshll.u32 %s9, 4
      %s278 = int_to_ptr.hbm [resolvable:$true] %s277
      %280 = dma.vmem_to_hbm [thread:$0]  %s276, 32, %s278, [#allocation4]
    $region57: #{tpu_custom_call.1} parent=1 // pred_fallthru
      _
    // Predicated region
    $region58: #{tpu_custom_call.1} parent=1 // pred_check
      _
    $region59: #{tpu_custom_call.1} parent=1 // pred_check_branch
      %282 = sbr.rel (0) target = $region61
    $region60: #{tpu_custom_call.1} parent=1 // pred_region
      %284 = dma.done [#allocation4], 32
    $region61: #{tpu_custom_call.1} parent=1 // pred_fallthru
      _
    %285 = vsyncpa [#allocation3], 1
    %286 = vsyncpa [#allocation6], 1
    %287 = vsyncpa [#allocation9], 1
    %288 = vsyncpa [#allocation4], 1

</llo_original>
